<compile_context>
chip_gen: v7x
topology: tpu7x:2x2x1
jax: 0.10.0
libtpu: 0.0.40
codegen_flags: <defaults>
</compile_context>

<pallas_src>
import math

import jax
import jax.numpy as jnp
from jax.experimental import pallas as pl
from jax.experimental.pallas import tpu as pltpu


def _flatten_copy_kernel(x_ref, o_ref):
    # Pure streaming copy of the current (tr, L) slab tile. Kept a raw block
    # copy on purpose: flatten has zero arithmetic, and any per-element work
    # here would serialize stores on v5e's single vector-store slot.
    o_ref[...] = x_ref[...]


# Conservative per-call VMEM budget for the pipelined copy. Pallas
# double-buffers both the input and the output block (2 in + 2 out), so the
# per-tile footprint is ~4x the block bytes. 16 MiB of block bytes stays well
# under the default scoped VMEM limit on v5e/v6e (128 MiB phys) *and* on
# v7x (64 MiB phys / 32 MiB default scoped).
_VMEM_BLOCK_BUDGET = 16 * 1024 * 1024

# Candidate lane widths (multiples of 128) for the slab view, widest first.
_LANE_CANDIDATES = (2048, 1024, 512, 256, 128)


def _choose_slab(total):
    """Pick (rows, lanes): a lane-dense 2D view of the flat buffer, lanes % 128 == 0."""
    # Prefer the widest lane count that still leaves >= 8 rows (full sublanes).
    for lane in _LANE_CANDIDATES:
        if total % lane == 0 and total // lane >= 8:
            return total // lane, lane
    # Otherwise take the widest lane count that divides at all (tiny inputs).
    for lane in _LANE_CANDIDATES:
        if total % lane == 0:
            return total // lane, lane
    return None


def bound_flatten(x, *, force_copy=True):
    """Equivalent of BoundFlatten.forward: (N, C, H, W) -> (N, C*H*W).

    The reshape is metadata-only; pass force_copy=False to skip the Pallas
    copy entirely (the fastest option whenever the flatten is not fused into a
    consumer kernel).
    """
    n = x.shape[0]
    feat = math.prod(x.shape[1:])
    x2d = x.reshape(n, feat)  # metadata-only, same ordering as torch .view(N, -1)

    if not force_copy:
        return x2d

    total = n * feat
    slab_dims = _choose_slab(total)
    if slab_dims is None:
        # Element count has no 128-multiple factor: an aligned, unmasked copy
        # isn't possible. The reshape above already *is* the flatten, so just
        # return it instead of running a masked, sub-roofline copy.
        return x2d
    rows, lanes = slab_dims
    slab = x2d.reshape(rows, lanes)

    itemsize = jnp.dtype(x.dtype).itemsize
    # Max rows per tile such that 4x (double-buffered in + out) blocks fit budget.
    max_rows = max(8, _VMEM_BLOCK_BUDGET // (4 * lanes * itemsize))

    if rows % 8 == 0:
        # Largest multiple-of-8 divisor of `rows` that fits the budget: every
        # block is sublane-full and stores are unmasked `vst`.
        tr = min(rows, (max_rows // 8) * 8)
        while tr >= 8 and rows % tr != 0:
            tr -= 8
        tr = max(tr, 8)
        grid = (rows // tr,)
    elif rows * lanes * itemsize * 4 <= _VMEM_BLOCK_BUDGET:
        # Small, oddly-sized row count: one full-extent block (legal because
        # the block dim equals the full array dim).
        tr = rows
        grid = (1,)
    else:
        # Large, oddly-sized row count: tile in multiples of 8 and let Pallas
        # mask only the final partial block.
        tr = (max_rows // 8) * 8
        grid = (pl.cdiv(rows, tr),)

    out = pl.pallas_call(
        _flatten_copy_kernel,
        out_shape=jax.ShapeDtypeStruct((rows, lanes), x.dtype),
        grid_spec=pltpu.PrefetchScalarGridSpec(
            num_scalar_prefetch=0,
            grid=grid,
            in_specs=[pl.BlockSpec((tr, lanes), lambda i: (i, 0))],
            out_specs=pl.BlockSpec((tr, lanes), lambda i: (i, 0)),
        ),
        compiler_params=pltpu.CompilerParams(
            # Independent row tiles -> shard the grid across v7x's 2 TensorCores;
            # harmless no-op on single-core v5e/v6e.
            dimension_semantics=("parallel",),
        ),
    )(slab)
    return out.reshape(n, feat)


if __name__ == "__main__":
    key = jax.random.PRNGKey(0)

    # Small NCHW input consistent with a conv feature map: (N=2, C=4, H=16, W=16)
    x = jax.random.normal(key, (2, 4, 16, 16), dtype=jnp.float32)
    y = jax.block_until_ready(bound_flatten(x))
    ref = x.reshape(x.shape[0], -1)
    assert y.shape == (2, 4 * 16 * 16), y.shape
    assert jnp.array_equal(y, ref), "flatten kernel mismatch (aligned path)"

    # Exercise the full-extent-rows path (row count not a multiple of 8).
    x2 = jax.random.normal(jax.random.PRNGKey(1), (2, 4, 8, 28), dtype=jnp.float32)
    y2 = jax.block_until_ready(bound_flatten(x2))
    assert jnp.array_equal(y2, x2.reshape(2, -1)), "flatten kernel mismatch (odd rows)"

    # Exercise the unaligned fallback (metadata-only reshape, no copy kernel).
    x3 = jax.random.normal(jax.random.PRNGKey(2), (2, 3, 7, 7), dtype=jnp.float32)
    y3 = jax.block_until_ready(bound_flatten(x3))
    assert jnp.array_equal(y3, x3.reshape(2, -1)), "flatten fallback mismatch"

    print("KERNEL_OK")
</pallas_src>

<mosaic_0001>
module attributes {stable_mosaic.version = 11 : i64} {
  func.func @_flatten_copy_kernel(%arg0: i32, %arg1: memref<8x256xf32, #tpu.memory_space<vmem>>, %arg2: memref<8x256xf32, #tpu.memory_space<vmem>>) attributes {dimension_semantics = [#tpu.dimension_semantics<parallel>], iteration_bounds = array<i64: 1>, scalar_prefetch = 0 : i64, scratch_operands = 0 : i64, tpu.core_type = #tpu.core_type<tc>, window_params = [{transform_indices = @transform_0, window_bounds = array<i64: 8, 256>}, {transform_indices = @transform_1, window_bounds = array<i64: 8, 256>}]} {
    %c0 = arith.constant 0 : index
    %c0_0 = arith.constant 0 : index
    %0 = vector.load %arg1[%c0, %c0_0] : memref<8x256xf32, #tpu.memory_space<vmem>>, vector<8x256xf32>
    %c0_1 = arith.constant 0 : index
    %c0_2 = arith.constant 0 : index
    %1 = vector.load %arg2[%c0_1, %c0_2] : memref<8x256xf32, #tpu.memory_space<vmem>>, vector<8x256xf32>
    tpu.vector_store %arg2[%c0_1, %c0_2], %0 {strides = array<i32>} : memref<8x256xf32, #tpu.memory_space<vmem>>, vector<8x256xf32>,
    return
  }
  func.func @transform_0(%arg0: i32) -> (i32, i32) {
    %c0_i32 = arith.constant 0 : i32
    %c0_i32_0 = arith.constant 0 : i32
    return %arg0, %c0_i32 : i32, i32
  }
  func.func @transform_1(%arg0: i32) -> (i32, i32) {
    %c0_i32 = arith.constant 0 : i32
    %c0_i32_0 = arith.constant 0 : i32
    return %arg0, %c0_i32 : i32, i32
  }
}

</mosaic_0001>

<llo_original>
// kernel: tpu_custom_call.1
$region0: #{tpu_custom_call.1}
  #allocation0 [shape = 'u32[]', space=smem, size = 0x4, offset = 0x4, fixed_abs, tag = 'smem constant byte address 0x4 - core index']
  #allocation1 [shape = 'u32[144,128]{1,0:T(1,128)}', space=vmem, size = 0x12000, scoped, tag = 'internal scratch']
  %s0 = inlined_call_operand.hbm [shape: f32[8,256], index: 0, kind: input, shape index: {}]
  %s1 = inlined_call_operand.hbm [shape: f32[8,256], index: 1, kind: output, shape index: {}]
  %s2 = sld [smem:[#allocation0]]
  $region18: #{tpu_custom_call.1} parent=0
    _
  %s4 = ssub.s32 1, %s2
  %s5 = scalar_select 0, %s4, %s2
  $region1: #{tpu_custom_call.1} parent=0
    #allocation2 [shape = 'u8[8192]{0}', space=vmem, size = 0x2000, scoped, tag = 'input window, operand 0, single buffered']
    #allocation3 [shape = 's32[1]{0}', space=sflag, size = 0x4, scoped, tag = 'scoped memory for tpu_custom_call.1']
    #allocation4 [shape = 's32[1]{0}', space=sflag, size = 0x4, scoped, tag = 'scoped memory for tpu_custom_call.1']
    #allocation5 [shape = 'u8[8192]{0}', space=vmem, size = 0x2000, scoped, tag = 'output window, operand 0, single buffered']
    %6 = vsyncpa [#allocation3], 0
    %7 = vsyncpa [#allocation4], 0
    // Predicated region
    $region2: #{tpu_custom_call.1} parent=1 // pred_check
      _
    $region3: #{tpu_custom_call.1} parent=1 // pred_check_branch
      %9 = sbr.rel (0) target = $region5
    $region4: #{tpu_custom_call.1} parent=1 // pred_region
      %s11 = ssub.s32 256, 256
      %12 = vsyncadd [#allocation3], %s11
      %s14 = sshll.u32 [#allocation2], 4
      %s15 = int_to_ptr.vmem [resolvable:$true] %s14
      %17 = dma.hbm_to_vmem [thread:$0]  %s0, 256, %s15, [#allocation3]
    $region5: #{tpu_custom_call.1} parent=1 // pred_fallthru
      _
    // Predicated region
    $region6: #{tpu_custom_call.1} parent=1 // pred_check
      _
    $region7: #{tpu_custom_call.1} parent=1 // pred_check_branch
      %19 = sbr.rel (0) target = $region9
    $region8: #{tpu_custom_call.1} parent=1 // pred_region
      %20 = dma.done [#allocation3], 256
    $region9: #{tpu_custom_call.1} parent=1 // pred_fallthru
      _
    %v21 = vld [vmem:[#allocation2] sm:$0xff]
    %v22 = vld [vmem:[#allocation2 + $0x8] sm:$0xff]
    %23 = vst [vmem:[#allocation5] sm:$0xff] %v21
    %24 = vst [vmem:[#allocation5 + $0x8] sm:$0xff] %v22
    // Predicated region
    $region10: #{tpu_custom_call.1} parent=1 // pred_check
      _
    $region11: #{tpu_custom_call.1} parent=1 // pred_check_branch
      %26 = sbr.rel (0) target = $region13
    $region12: #{tpu_custom_call.1} parent=1 // pred_region
      %s28 = ssub.s32 256, 256
      %29 = vsyncadd [#allocation4], %s28
      %s31 = sshll.u32 [#allocation5], 4
      %s32 = int_to_ptr.vmem [resolvable:$true] %s31
      %34 = dma.vmem_to_hbm [thread:$0]  %s32, 256, %s1, [#allocation4]
    $region13: #{tpu_custom_call.1} parent=1 // pred_fallthru
      _
    // Predicated region
    $region14: #{tpu_custom_call.1} parent=1 // pred_check
      _
    $region15: #{tpu_custom_call.1} parent=1 // pred_check_branch
      %36 = sbr.rel (0) target = $region17
    $region16: #{tpu_custom_call.1} parent=1 // pred_region
      %37 = dma.done [#allocation4], 256
    $region17: #{tpu_custom_call.1} parent=1 // pred_fallthru
      _
    %38 = vsyncpa [#allocation3], 1
    %39 = vsyncpa [#allocation4], 1

</llo_original>
